<compile_context>
chip_gen: v7x
topology: tpu7x:2x2x1
jax: 0.10.0
libtpu: 0.0.40
codegen_flags: <defaults>
</compile_context>

<pallas_src>
import functools

import jax
import jax.numpy as jnp
from jax.experimental import pallas as pl
from jax.experimental.pallas import tpu as pltpu


def _round_up(x, m):
    return ((x + m - 1) // m) * m


def _masked_log_softmax(z, num_valid):
    """log_softmax over the first `num_valid` lanes of a (BN, CP) tile."""
    bn, cp = z.shape
    lane = jax.lax.broadcasted_iota(jnp.int32, (bn, cp), 1)
    valid = lane < num_valid
    zm = jnp.where(valid, z, -jnp.inf)
    m = jnp.max(zm, axis=1, keepdims=True)
    e = jnp.where(valid, jnp.exp(z - m), 0.0)
    lse = jnp.log(jnp.sum(e, axis=1, keepdims=True)) + m
    return z - lse


def _head_kernel(C, toks_ref, tab_ref, w_ref, b_ref, stdev_ref, noise_ref,
                 logp_ref):
    """Fused gather+pool (counts matmul) -> linear -> fuzz -> log_softmax."""
    BN, T = toks_ref.shape
    VP = tab_ref.shape[0]

    viota = jax.lax.broadcasted_iota(jnp.int32, (BN, VP), 1)
    counts = jnp.zeros((BN, VP), jnp.float32)
    for t in range(T):                                   # T static, unrolled
        counts = counts + (toks_ref[:, t:t + 1] == viota).astype(jnp.float32)

    # mean-pooled embeddings: (counts/T) @ table, bf16 operands, f32 accum
    pooled = jnp.dot(counts.astype(jnp.bfloat16), tab_ref[...],
                     preferred_element_type=jnp.float32) * (1.0 / T)

    logits = jnp.dot(pooled, w_ref[...],
                     preferred_element_type=jnp.float32) + b_ref[...]
    z = logits + noise_ref[...] * stdev_ref[0]
    logp_ref[...] = _masked_log_softmax(z, C)


def _head_embs_kernel(C, toks_ref, tab_ref, w_ref, b_ref, stdev_ref, noise_ref,
                      logp_ref, embs_ref):
    """Same head, but also materializes per-token embeddings (T, BN, EP)."""
    BN, T = toks_ref.shape
    VP, EP = tab_ref.shape

    viota = jax.lax.broadcasted_iota(jnp.int32, (BN, VP), 1)
    tab = tab_ref[...]
    pooled = jnp.zeros((BN, EP), jnp.float32)
    for t in range(T):                                   # T static, unrolled
        onehot = (toks_ref[:, t:t + 1] == viota).astype(jnp.bfloat16)
        emb_t = jnp.dot(onehot, tab, preferred_element_type=jnp.float32)
        embs_ref[t] = emb_t                              # lane-dense (BN, EP) store
        pooled = pooled + emb_t
    pooled = pooled * (1.0 / T)

    logits = jnp.dot(pooled, w_ref[...],
                     preferred_element_type=jnp.float32) + b_ref[...]
    z = logits + noise_ref[...] * stdev_ref[0]
    logp_ref[...] = _masked_log_softmax(z, C)


def discriminator_forward(toks, emb_table, w, b, stdev, noise_key,
                          return_embs=False):
    """JAX wrapper mirroring Discriminator.forward.

    toks: (N, T) int32 token ids, or a list/tuple of (N, Ti) pieces
          (concatenated along the last axis, like the torch.cat in forward).
    Returns log_probs (N, C) [and embs (N, T, E) if return_embs].
    """
    if isinstance(toks, (list, tuple)):
        toks = jnp.concatenate(toks, axis=-1)
    toks = toks.astype(jnp.int32)

    N, T = toks.shape
    V, E = emb_table.shape
    C = w.shape[1]

    # ---- padding for lane density / sublane alignment ----
    BN = min(128, _round_up(N, 8))       # batch rows per grid step
    Np = _round_up(N, BN)
    VP = _round_up(V, 128)
    EP = _round_up(E, 128)
    CP = _round_up(C, 128)

    toks_p = jnp.zeros((Np, T), jnp.int32).at[:N].set(toks)
    tab_p = jnp.zeros((VP, EP), jnp.bfloat16).at[:V, :E].set(
        emb_table.astype(jnp.bfloat16))
    w_p = jnp.zeros((EP, CP), jnp.float32).at[:E, :C].set(
        w.astype(jnp.float32))
    b_p = jnp.zeros((1, CP), jnp.float32).at[:, :C].set(
        jnp.asarray(b, jnp.float32).reshape(1, C))
    stdev_p = jnp.asarray(stdev, jnp.float32).reshape(1)
    # Fresh fuzz every call (parity with torch's in-forward .normal_()).
    noise = jax.random.normal(noise_key, (Np, CP), jnp.float32)

    grid = (Np // BN,)

    in_specs = [
        pl.BlockSpec((BN, T), lambda i: (i, 0)),          # token ids
        pl.BlockSpec((VP, EP), lambda i: (0, 0)),         # embedding table (bf16)
        pl.BlockSpec((EP, CP), lambda i: (0, 0)),         # head weight
        pl.BlockSpec((1, CP), lambda i: (0, 0)),          # head bias
        pl.BlockSpec(memory_space=pltpu.MemorySpace.SMEM),  # stdev scalar
        pl.BlockSpec((BN, CP), lambda i: (i, 0)),         # fuzz noise
    ]

    if return_embs:
        kernel = functools.partial(_head_embs_kernel, C)
        out_shape = (jax.ShapeDtypeStruct((Np, CP), jnp.float32),
                     jax.ShapeDtypeStruct((T, Np, EP), jnp.float32))
        out_specs = (pl.BlockSpec((BN, CP), lambda i: (i, 0)),
                     pl.BlockSpec((T, BN, EP), lambda i: (0, i, 0)))
    else:
        kernel = functools.partial(_head_kernel, C)
        out_shape = jax.ShapeDtypeStruct((Np, CP), jnp.float32)
        out_specs = pl.BlockSpec((BN, CP), lambda i: (i, 0))

    # VMEM budget: double-buffered inputs/outputs + intermediate slack.
    bytes_io = 2 * (BN * T * 4 + VP * EP * 2 + EP * CP * 4 + CP * 4
                    + BN * CP * 4 + BN * CP * 4
                    + (T * BN * EP * 4 if return_embs else 0))
    scratch_est = 8 * BN * max(VP, EP, CP) * 4
    vmem_limit = min(max(bytes_io + scratch_est + (4 << 20), 16 << 20), 64 << 20)

    outs = pl.pallas_call(
        kernel,
        out_shape=out_shape,
        grid=grid,
        in_specs=in_specs,
        out_specs=out_specs,
        compiler_params=pltpu.CompilerParams(
            dimension_semantics=("parallel",),
            vmem_limit_bytes=vmem_limit),
    )(toks_p, tab_p, w_p, b_p, stdev_p, noise)

    if return_embs:
        logp_p, embs_p = outs
        log_probs = logp_p[:N, :C]
        embs = jnp.transpose(embs_p, (1, 0, 2))[:N, :, :E]
        return log_probs, embs
    return outs[:N, :C]


if __name__ == "__main__":
    # Small shapes implied by the module: batch N, sequence T, vocab V,
    # tok_emb_dim E, and C discriminator classes.
    N, T, V, E, C = 4, 8, 32, 32, 8

    key = jax.random.PRNGKey(0)
    k_emb, k_w, k_b, k_std, k_tok, k_noise = jax.random.split(key, 6)

    # nn.Embedding(vocab_size, tok_emb_dim, padding_idx=0): N(0,1) init,
    # padding row zeroed (env != SYNTH branch).
    emb_table = jax.random.normal(k_emb, (V, E), jnp.float32)
    emb_table = emb_table.at[0].set(0.0)

    # Linear head of the concrete `_forward`.
    w = jax.random.normal(k_w, (E, C), jnp.float32) * 0.1
    b = jax.random.normal(k_b, (1, C), jnp.float32) * 0.1

    # self.stdev = nn.Parameter(torch.randn(1) * 0.1)
    stdev = jax.random.normal(k_std, (1,), jnp.float32) * 0.1

    toks = jax.random.randint(k_tok, (N, T), 0, V, dtype=jnp.int32)

    log_probs, embs = discriminator_forward(
        toks, emb_table, w, b, stdev, k_noise, return_embs=True)
    log_probs2 = discriminator_forward(
        toks, emb_table, w, b, stdev, k_noise, return_embs=False)
    jax.block_until_ready((log_probs, embs, log_probs2))

    assert log_probs.shape == (N, C)
    assert log_probs2.shape == (N, C)
    assert embs.shape == (N, T, E)
    # log_softmax rows must sum (in prob space) to 1.
    assert jnp.allclose(jnp.sum(jnp.exp(log_probs), axis=1), 1.0, atol=1e-4)
    assert jnp.allclose(jnp.sum(jnp.exp(log_probs2), axis=1), 1.0, atol=1e-4)
    # The fused (no-embs) path and the embs path must agree (same noise key).
    assert jnp.allclose(log_probs, log_probs2, atol=1e-3)
    # Returned embeddings are the (bf16-rounded) gathered table rows.
    ref_embs = emb_table.astype(jnp.bfloat16).astype(jnp.float32)[toks]
    assert jnp.allclose(embs, ref_embs, atol=1e-6)

    print("KERNEL_OK")
</pallas_src>

<mosaic_0001>
module attributes {stable_mosaic.version = 11 : i64} {
  func.func @_head_embs_kernel(%arg0: i32, %arg1: memref<8x8xi32, #tpu.memory_space<vmem>>, %arg2: memref<128x128xbf16, #tpu.memory_space<vmem>>, %arg3: memref<128x128xf32, #tpu.memory_space<vmem>>, %arg4: memref<1x128xf32, #tpu.memory_space<vmem>>, %arg5: memref<1xf32, #tpu.memory_space<smem>>, %arg6: memref<8x128xf32, #tpu.memory_space<vmem>>, %arg7: memref<8x128xf32, #tpu.memory_space<vmem>>, %arg8: memref<8x8x128xf32, #tpu.memory_space<vmem>>) attributes {dimension_semantics = [#tpu.dimension_semantics<parallel>], iteration_bounds = array<i64: 1>, scalar_prefetch = 0 : i64, scratch_operands = 0 : i64, tpu.core_type = #tpu.core_type<tc>, window_params = [{transform_indices = @transform_0, window_bounds = array<i64: 8, 8>}, {pipeline_mode = #tpu.pipeline_mode<synchronous>, transform_indices = @transform_1, window_bounds = array<i64: 128, 128>}, {pipeline_mode = #tpu.pipeline_mode<synchronous>, transform_indices = @transform_2, window_bounds = array<i64: 128, 128>}, {pipeline_mode = #tpu.pipeline_mode<synchronous>, transform_indices = @transform_3, window_bounds = array<i64: 1, 128>}, {transform_indices = @transform_4, window_bounds = array<i64: 1>}, {transform_indices = @transform_5, window_bounds = array<i64: 8, 128>}, {transform_indices = @transform_6, window_bounds = array<i64: 8, 128>}, {transform_indices = @transform_7, window_bounds = array<i64: 8, 8, 128>}]} {
    %0 = tpu.iota {dimensions = array<i32: 1>} : vector<8x128xi32>
    %c0 = arith.constant 0 : index
    %c0_0 = arith.constant 0 : index
    %1 = vector.load %arg2[%c0, %c0_0] : memref<128x128xbf16, #tpu.memory_space<vmem>>, vector<128x128xbf16>
    %cst = arith.constant 0.000000e+00 : f32
    %2 = vector.broadcast %cst : f32 to vector<8x128xf32>
    %c0_1 = arith.constant 0 : index
    %c0_2 = arith.constant 0 : index
    %3 = vector.load %arg1[%c0_1, %c0_2] : memref<8x8xi32, #tpu.memory_space<vmem>>, vector<8x1xi32>
    %4 = vector.broadcast %3 : vector<8x1xi32> to vector<8x128xi32>
    %5 = arith.cmpi eq, %4, %0 : vector<8x128xi32>
    %6 = arith.extui %5 : vector<8x128xi1> to vector<8x128xi32>
    %7 = arith.sitofp %6 : vector<8x128xi32> to vector<8x128xf32>
    %8 = arith.truncf %7 : vector<8x128xf32> to vector<8x128xbf16>
    %cst_3 = arith.constant dense<0.000000e+00> : vector<8x128xf32>
    %9 = tpu.matmul %8, %1, %cst_3 {dimension_numbers = #tpu.dot_dimension_numbers<[1], [0], [0], [1], [0, 0, 1, 1], [], []>} : vector<8x128xbf16>, vector<128x128xbf16>, vector<8x128xf32> -> vector<8x128xf32>
    %c0_4 = arith.constant 0 : index
    %c0_5 = arith.constant 0 : index
    %c0_6 = arith.constant 0 : index
    %10 = vector.load %arg8[%c0_4, %c0_5, %c0_6] : memref<8x8x128xf32, #tpu.memory_space<vmem>>, vector<1x8x128xf32>
    %11 = vector.shape_cast %10 : vector<1x8x128xf32> to vector<8x128xf32>
    %12 = vector.shape_cast %9 : vector<8x128xf32> to vector<1x8x128xf32>
    tpu.vector_store %arg8[%c0_4, %c0_5, %c0_6], %12 {strides = array<i32>} : memref<8x8x128xf32, #tpu.memory_space<vmem>>, vector<1x8x128xf32>,
    %13 = arith.addf %2, %9 : vector<8x128xf32>
    %c0_7 = arith.constant 0 : index
    %c1 = arith.constant 1 : index
    %14 = vector.load %arg1[%c0_7, %c1] : memref<8x8xi32, #tpu.memory_space<vmem>>, vector<8x1xi32>
    %15 = vector.broadcast %14 : vector<8x1xi32> to vector<8x128xi32>
    %16 = arith.cmpi eq, %15, %0 : vector<8x128xi32>
    %17 = arith.extui %16 : vector<8x128xi1> to vector<8x128xi32>
    %18 = arith.sitofp %17 : vector<8x128xi32> to vector<8x128xf32>
    %19 = arith.truncf %18 : vector<8x128xf32> to vector<8x128xbf16>
    %cst_8 = arith.constant dense<0.000000e+00> : vector<8x128xf32>
    %20 = tpu.matmul %19, %1, %cst_8 {dimension_numbers = #tpu.dot_dimension_numbers<[1], [0], [0], [1], [0, 0, 1, 1], [], []>} : vector<8x128xbf16>, vector<128x128xbf16>, vector<8x128xf32> -> vector<8x128xf32>
    %c1_9 = arith.constant 1 : index
    %c0_10 = arith.constant 0 : index
    %c0_11 = arith.constant 0 : index
    %21 = vector.load %arg8[%c1_9, %c0_10, %c0_11] : memref<8x8x128xf32, #tpu.memory_space<vmem>>, vector<1x8x128xf32>
    %22 = vector.shape_cast %21 : vector<1x8x128xf32> to vector<8x128xf32>
    %23 = vector.shape_cast %20 : vector<8x128xf32> to vector<1x8x128xf32>
    tpu.vector_store %arg8[%c1_9, %c0_10, %c0_11], %23 {strides = array<i32>} : memref<8x8x128xf32, #tpu.memory_space<vmem>>, vector<1x8x128xf32>,
    %24 = arith.addf %13, %20 : vector<8x128xf32>
    %c0_12 = arith.constant 0 : index
    %c2 = arith.constant 2 : index
    %25 = vector.load %arg1[%c0_12, %c2] : memref<8x8xi32, #tpu.memory_space<vmem>>, vector<8x1xi32>
    %26 = vector.broadcast %25 : vector<8x1xi32> to vector<8x128xi32>
    %27 = arith.cmpi eq, %26, %0 : vector<8x128xi32>
    %28 = arith.extui %27 : vector<8x128xi1> to vector<8x128xi32>
    %29 = arith.sitofp %28 : vector<8x128xi32> to vector<8x128xf32>
    %30 = arith.truncf %29 : vector<8x128xf32> to vector<8x128xbf16>
    %cst_13 = arith.constant dense<0.000000e+00> : vector<8x128xf32>
    %31 = tpu.matmul %30, %1, %cst_13 {dimension_numbers = #tpu.dot_dimension_numbers<[1], [0], [0], [1], [0, 0, 1, 1], [], []>} : vector<8x128xbf16>, vector<128x128xbf16>, vector<8x128xf32> -> vector<8x128xf32>
    %c2_14 = arith.constant 2 : index
    %c0_15 = arith.constant 0 : index
    %c0_16 = arith.constant 0 : index
    %32 = vector.load %arg8[%c2_14, %c0_15, %c0_16] : memref<8x8x128xf32, #tpu.memory_space<vmem>>, vector<1x8x128xf32>
    %33 = vector.shape_cast %32 : vector<1x8x128xf32> to vector<8x128xf32>
    %34 = vector.shape_cast %31 : vector<8x128xf32> to vector<1x8x128xf32>
    tpu.vector_store %arg8[%c2_14, %c0_15, %c0_16], %34 {strides = array<i32>} : memref<8x8x128xf32, #tpu.memory_space<vmem>>, vector<1x8x128xf32>,
    %35 = arith.addf %24, %31 : vector<8x128xf32>
    %c0_17 = arith.constant 0 : index
    %c3 = arith.constant 3 : index
    %36 = vector.load %arg1[%c0_17, %c3] : memref<8x8xi32, #tpu.memory_space<vmem>>, vector<8x1xi32>
    %37 = vector.broadcast %36 : vector<8x1xi32> to vector<8x128xi32>
    %38 = arith.cmpi eq, %37, %0 : vector<8x128xi32>
    %39 = arith.extui %38 : vector<8x128xi1> to vector<8x128xi32>
    %40 = arith.sitofp %39 : vector<8x128xi32> to vector<8x128xf32>
    %41 = arith.truncf %40 : vector<8x128xf32> to vector<8x128xbf16>
    %cst_18 = arith.constant dense<0.000000e+00> : vector<8x128xf32>
    %42 = tpu.matmul %41, %1, %cst_18 {dimension_numbers = #tpu.dot_dimension_numbers<[1], [0], [0], [1], [0, 0, 1, 1], [], []>} : vector<8x128xbf16>, vector<128x128xbf16>, vector<8x128xf32> -> vector<8x128xf32>
    %c3_19 = arith.constant 3 : index
    %c0_20 = arith.constant 0 : index
    %c0_21 = arith.constant 0 : index
    %43 = vector.load %arg8[%c3_19, %c0_20, %c0_21] : memref<8x8x128xf32, #tpu.memory_space<vmem>>, vector<1x8x128xf32>
    %44 = vector.shape_cast %43 : vector<1x8x128xf32> to vector<8x128xf32>
    %45 = vector.shape_cast %42 : vector<8x128xf32> to vector<1x8x128xf32>
    tpu.vector_store %arg8[%c3_19, %c0_20, %c0_21], %45 {strides = array<i32>} : memref<8x8x128xf32, #tpu.memory_space<vmem>>, vector<1x8x128xf32>,
    %46 = arith.addf %35, %42 : vector<8x128xf32>
    %c0_22 = arith.constant 0 : index
    %c4 = arith.constant 4 : index
    %47 = vector.load %arg1[%c0_22, %c4] : memref<8x8xi32, #tpu.memory_space<vmem>>, vector<8x1xi32>
    %48 = vector.broadcast %47 : vector<8x1xi32> to vector<8x128xi32>
    %49 = arith.cmpi eq, %48, %0 : vector<8x128xi32>
    %50 = arith.extui %49 : vector<8x128xi1> to vector<8x128xi32>
    %51 = arith.sitofp %50 : vector<8x128xi32> to vector<8x128xf32>
    %52 = arith.truncf %51 : vector<8x128xf32> to vector<8x128xbf16>
    %cst_23 = arith.constant dense<0.000000e+00> : vector<8x128xf32>
    %53 = tpu.matmul %52, %1, %cst_23 {dimension_numbers = #tpu.dot_dimension_numbers<[1], [0], [0], [1], [0, 0, 1, 1], [], []>} : vector<8x128xbf16>, vector<128x128xbf16>, vector<8x128xf32> -> vector<8x128xf32>
    %c4_24 = arith.constant 4 : index
    %c0_25 = arith.constant 0 : index
    %c0_26 = arith.constant 0 : index
    %54 = vector.load %arg8[%c4_24, %c0_25, %c0_26] : memref<8x8x128xf32, #tpu.memory_space<vmem>>, vector<1x8x128xf32>
    %55 = vector.shape_cast %54 : vector<1x8x128xf32> to vector<8x128xf32>
    %56 = vector.shape_cast %53 : vector<8x128xf32> to vector<1x8x128xf32>
    tpu.vector_store %arg8[%c4_24, %c0_25, %c0_26], %56 {strides = array<i32>} : memref<8x8x128xf32, #tpu.memory_space<vmem>>, vector<1x8x128xf32>,
    %57 = arith.addf %46, %53 : vector<8x128xf32>
    %c0_27 = arith.constant 0 : index
    %c5 = arith.constant 5 : index
    %58 = vector.load %arg1[%c0_27, %c5] : memref<8x8xi32, #tpu.memory_space<vmem>>, vector<8x1xi32>
    %59 = vector.broadcast %58 : vector<8x1xi32> to vector<8x128xi32>
    %60 = arith.cmpi eq, %59, %0 : vector<8x128xi32>
    %61 = arith.extui %60 : vector<8x128xi1> to vector<8x128xi32>
    %62 = arith.sitofp %61 : vector<8x128xi32> to vector<8x128xf32>
    %63 = arith.truncf %62 : vector<8x128xf32> to vector<8x128xbf16>
    %cst_28 = arith.constant dense<0.000000e+00> : vector<8x128xf32>
    %64 = tpu.matmul %63, %1, %cst_28 {dimension_numbers = #tpu.dot_dimension_numbers<[1], [0], [0], [1], [0, 0, 1, 1], [], []>} : vector<8x128xbf16>, vector<128x128xbf16>, vector<8x128xf32> -> vector<8x128xf32>
    %c5_29 = arith.constant 5 : index
    %c0_30 = arith.constant 0 : index
    %c0_31 = arith.constant 0 : index
    %65 = vector.load %arg8[%c5_29, %c0_30, %c0_31] : memref<8x8x128xf32, #tpu.memory_space<vmem>>, vector<1x8x128xf32>
    %66 = vector.shape_cast %65 : vector<1x8x128xf32> to vector<8x128xf32>
    %67 = vector.shape_cast %64 : vector<8x128xf32> to vector<1x8x128xf32>
    tpu.vector_store %arg8[%c5_29, %c0_30, %c0_31], %67 {strides = array<i32>} : memref<8x8x128xf32, #tpu.memory_space<vmem>>, vector<1x8x128xf32>,
    %68 = arith.addf %57, %64 : vector<8x128xf32>
    %c0_32 = arith.constant 0 : index
    %c6 = arith.constant 6 : index
    %69 = vector.load %arg1[%c0_32, %c6] : memref<8x8xi32, #tpu.memory_space<vmem>>, vector<8x1xi32>
    %70 = vector.broadcast %69 : vector<8x1xi32> to vector<8x128xi32>
    %71 = arith.cmpi eq, %70, %0 : vector<8x128xi32>
    %72 = arith.extui %71 : vector<8x128xi1> to vector<8x128xi32>
    %73 = arith.sitofp %72 : vector<8x128xi32> to vector<8x128xf32>
    %74 = arith.truncf %73 : vector<8x128xf32> to vector<8x128xbf16>
    %cst_33 = arith.constant dense<0.000000e+00> : vector<8x128xf32>
    %75 = tpu.matmul %74, %1, %cst_33 {dimension_numbers = #tpu.dot_dimension_numbers<[1], [0], [0], [1], [0, 0, 1, 1], [], []>} : vector<8x128xbf16>, vector<128x128xbf16>, vector<8x128xf32> -> vector<8x128xf32>
    %c6_34 = arith.constant 6 : index
    %c0_35 = arith.constant 0 : index
    %c0_36 = arith.constant 0 : index
    %76 = vector.load %arg8[%c6_34, %c0_35, %c0_36] : memref<8x8x128xf32, #tpu.memory_space<vmem>>, vector<1x8x128xf32>
    %77 = vector.shape_cast %76 : vector<1x8x128xf32> to vector<8x128xf32>
    %78 = vector.shape_cast %75 : vector<8x128xf32> to vector<1x8x128xf32>
    tpu.vector_store %arg8[%c6_34, %c0_35, %c0_36], %78 {strides = array<i32>} : memref<8x8x128xf32, #tpu.memory_space<vmem>>, vector<1x8x128xf32>,
    %79 = arith.addf %68, %75 : vector<8x128xf32>
    %c0_37 = arith.constant 0 : index
    %c7 = arith.constant 7 : index
    %80 = vector.load %arg1[%c0_37, %c7] : memref<8x8xi32, #tpu.memory_space<vmem>>, vector<8x1xi32>
    %81 = vector.broadcast %80 : vector<8x1xi32> to vector<8x128xi32>
    %82 = arith.cmpi eq, %81, %0 : vector<8x128xi32>
    %83 = arith.extui %82 : vector<8x128xi1> to vector<8x128xi32>
    %84 = arith.sitofp %83 : vector<8x128xi32> to vector<8x128xf32>
    %85 = arith.truncf %84 : vector<8x128xf32> to vector<8x128xbf16>
    %cst_38 = arith.constant dense<0.000000e+00> : vector<8x128xf32>
    %86 = tpu.matmul %85, %1, %cst_38 {dimension_numbers = #tpu.dot_dimension_numbers<[1], [0], [0], [1], [0, 0, 1, 1], [], []>} : vector<8x128xbf16>, vector<128x128xbf16>, vector<8x128xf32> -> vector<8x128xf32>
    %c7_39 = arith.constant 7 : index
    %c0_40 = arith.constant 0 : index
    %c0_41 = arith.constant 0 : index
    %87 = vector.load %arg8[%c7_39, %c0_40, %c0_41] : memref<8x8x128xf32, #tpu.memory_space<vmem>>, vector<1x8x128xf32>
    %88 = vector.shape_cast %87 : vector<1x8x128xf32> to vector<8x128xf32>
    %89 = vector.shape_cast %86 : vector<8x128xf32> to vector<1x8x128xf32>
    tpu.vector_store %arg8[%c7_39, %c0_40, %c0_41], %89 {strides = array<i32>} : memref<8x8x128xf32, #tpu.memory_space<vmem>>, vector<1x8x128xf32>,
    %90 = arith.addf %79, %86 : vector<8x128xf32>
    %cst_42 = arith.constant 1.250000e-01 : f32
    %91 = vector.broadcast %cst_42 : f32 to vector<8x128xf32>
    %92 = arith.mulf %90, %91 : vector<8x128xf32>
    %c0_43 = arith.constant 0 : index
    %c0_44 = arith.constant 0 : index
    %93 = vector.load %arg3[%c0_43, %c0_44] : memref<128x128xf32, #tpu.memory_space<vmem>>, vector<128x128xf32>
    %cst_45 = arith.constant dense<0.000000e+00> : vector<8x128xf32>
    %94 = tpu.matmul %92, %93, %cst_45 {dimension_numbers = #tpu.dot_dimension_numbers<[1], [0], [0], [1], [0, 0, 1, 1], [], []>} : vector<8x128xf32>, vector<128x128xf32>, vector<8x128xf32> -> vector<8x128xf32>
    %c0_46 = arith.constant 0 : index
    %c0_47 = arith.constant 0 : index
    %95 = vector.load %arg4[%c0_46, %c0_47] : memref<1x128xf32, #tpu.memory_space<vmem>>, vector<1x128xf32>
    %96 = vector.broadcast %95 : vector<1x128xf32> to vector<8x128xf32>
    %97 = arith.addf %94, %96 : vector<8x128xf32>
    %c0_48 = arith.constant 0 : index
    %c0_49 = arith.constant 0 : index
    %98 = vector.load %arg6[%c0_48, %c0_49] : memref<8x128xf32, #tpu.memory_space<vmem>>, vector<8x128xf32>
    %c0_50 = arith.constant 0 : index
    %99 = memref.load %arg5[%c0_50] : memref<1xf32, #tpu.memory_space<smem>>
    %100 = vector.broadcast %99 : f32 to vector<8x128xf32>
    %101 = arith.mulf %98, %100 : vector<8x128xf32>
    %102 = arith.addf %97, %101 : vector<8x128xf32>
    %103 = tpu.iota {dimensions = array<i32: 1>} : vector<8x128xi32>
    %c8_i32 = arith.constant 8 : i32
    %104 = vector.broadcast %c8_i32 : i32 to vector<8x128xi32>
    %105 = arith.cmpi slt, %103, %104 : vector<8x128xi32>
    %cst_51 = arith.constant 0xFF800000 : f32
    %106 = vector.broadcast %cst_51 : f32 to vector<8x128xf32>
    %107 = arith.select %105, %102, %106 : vector<8x128xi1>, vector<8x128xf32>
    %cst_52 = arith.constant dense<0xFF800000> : vector<8xf32>
    %108 = vector.multi_reduction <maximumf>, %107, %cst_52 [1] : vector<8x128xf32> to vector<8xf32>
    %109 = vector.shape_cast %108 : vector<8xf32> to vector<8x1xf32>
    %110 = vector.broadcast %109 : vector<8x1xf32> to vector<8x128xf32>
    %111 = arith.subf %102, %110 : vector<8x128xf32>
    %112 = math.exp %111 : vector<8x128xf32>
    %cst_53 = arith.constant 0.000000e+00 : f32
    %113 = vector.broadcast %cst_53 : f32 to vector<8x128xf32>
    %114 = arith.select %105, %112, %113 : vector<8x128xi1>, vector<8x128xf32>
    %cst_54 = arith.constant dense<0.000000e+00> : vector<8xf32>
    %115 = vector.multi_reduction <add>, %114, %cst_54 [1] : vector<8x128xf32> to vector<8xf32>
    %116 = vector.shape_cast %115 : vector<8xf32> to vector<8x1xf32>
    %117 = math.log %116 : vector<8x1xf32>
    %118 = arith.addf %117, %109 : vector<8x1xf32>
    %119 = vector.broadcast %118 : vector<8x1xf32> to vector<8x128xf32>
    %120 = arith.subf %102, %119 : vector<8x128xf32>
    %c0_55 = arith.constant 0 : index
    %c0_56 = arith.constant 0 : index
    %121 = vector.load %arg7[%c0_55, %c0_56] : memref<8x128xf32, #tpu.memory_space<vmem>>, vector<8x128xf32>
    tpu.vector_store %arg7[%c0_55, %c0_56], %120 {strides = array<i32>} : memref<8x128xf32, #tpu.memory_space<vmem>>, vector<8x128xf32>,
    return
  }
  func.func @transform_0(%arg0: i32) -> (i32, i32) {
    %c0_i32 = arith.constant 0 : i32
    %c0_i32_0 = arith.constant 0 : i32
    return %arg0, %c0_i32 : i32, i32
  }
  func.func @transform_1(%arg0: i32) -> (i32, i32) {
    %c0_i32 = arith.constant 0 : i32
    %c0_i32_0 = arith.constant 0 : i32
    %c0_i32_1 = arith.constant 0 : i32
    return %c0_i32, %c0_i32_0 : i32, i32
  }
  func.func @transform_2(%arg0: i32) -> (i32, i32) {
    %c0_i32 = arith.constant 0 : i32
    %c0_i32_0 = arith.constant 0 : i32
    %c0_i32_1 = arith.constant 0 : i32
    return %c0_i32, %c0_i32_0 : i32, i32
  }
  func.func @transform_3(%arg0: i32) -> (i32, i32) {
    %c0_i32 = arith.constant 0 : i32
    %c0_i32_0 = arith.constant 0 : i32
    %c0_i32_1 = arith.constant 0 : i32
    return %c0_i32, %c0_i32_0 : i32, i32
  }
  func.func @transform_4(%arg0: i32) -> i32 {
    %c0_i32 = arith.constant 0 : i32
    %c0_i32_0 = arith.constant 0 : i32
    return %c0_i32 : i32
  }
  func.func @transform_5(%arg0: i32) -> (i32, i32) {
    %c0_i32 = arith.constant 0 : i32
    %c0_i32_0 = arith.constant 0 : i32
    return %arg0, %c0_i32 : i32, i32
  }
  func.func @transform_6(%arg0: i32) -> (i32, i32) {
    %c0_i32 = arith.constant 0 : i32
    %c0_i32_0 = arith.constant 0 : i32
    return %arg0, %c0_i32 : i32, i32
  }
  func.func @transform_7(%arg0: i32) -> (i32, i32, i32) {
    %c0_i32 = arith.constant 0 : i32
    %c0_i32_0 = arith.constant 0 : i32
    %c0_i32_1 = arith.constant 0 : i32
    return %c0_i32, %arg0, %c0_i32_0 : i32, i32, i32
  }
}

</mosaic_0001>

<llo_original>
// kernel: tpu_custom_call.1
$region0: #{tpu_custom_call.1}
  #allocation0 [shape = 'u32[]', space=smem, size = 0x4, offset = 0x4, fixed_abs, tag = 'smem constant byte address 0x4 - core index']
  #allocation1 [shape = 'u32[144,128]{1,0:T(1,128)}', space=vmem, size = 0x12000, scoped, tag = 'internal scratch']
  #allocation2 [shape = 'f32[1]{0:T(128)S(6)}', space=smem, size = 0x200, scoped, tag = 'scoped memory for tpu_custom_call.1']
  %s0 = inlined_call_operand.hbm [shape: s32[8,8], index: 0, kind: input, shape index: {}]
  %s1 = inlined_call_operand.hbm [shape: bf16[128,128], index: 1, kind: input, shape index: {}]
  %s2 = inlined_call_operand.hbm [shape: f32[128,128], index: 2, kind: input, shape index: {}]
  %s3 = inlined_call_operand.vmem [shape: f32[1,128], index: 3, kind: input, shape index: {}]
  %s4 = inlined_call_operand.<no memory space> [shape: f32[1], index: 4, kind: input, shape index: {}]
  %s5 = inlined_call_operand.vmem [shape: f32[8,128], index: 5, kind: input, shape index: {}]
  %s6 = inlined_call_operand.hbm [shape: f32[8,128], index: 6, kind: output, shape index: {0}]
  %s7 = inlined_call_operand.hbm [shape: f32[8,8,128], index: 7, kind: output, shape index: {1}]
  %8 = xla_tuple %s6, %s7
  %s9 = sld [smem:[#allocation0]]
  $region54: #{tpu_custom_call.1} parent=0
    _
  %s11 = ssub.s32 1, %s9
  %s12 = scalar_select 0, %s11, %s9
  %13 = sst [smem:[#allocation2]] %s4
  $region1: #{tpu_custom_call.1} parent=0
    #allocation3 [shape = 'u8[4096]{0}', space=vmem, size = 0x1000, scoped, tag = 'input window, operand 0, single buffered']
    #allocation4 [shape = 's32[1]{0}', space=sflag, size = 0x4, scoped, tag = 'scoped memory for tpu_custom_call.1']
    #allocation5 [shape = 's32[1]{0}', space=sflag, size = 0x4, scoped, tag = 'scoped memory for tpu_custom_call.1']
    #allocation6 [shape = 'u8[32768]{0}', space=vmem, size = 0x8000, scoped, tag = 'input window, operand 1, single buffered']
    #allocation7 [shape = 's32[1]{0}', space=sflag, size = 0x4, scoped, tag = 'scoped memory for tpu_custom_call.1']
    #allocation8 [shape = 'u8[65536]{0}', space=vmem, size = 0x10000, scoped, tag = 'input window, operand 2, single buffered']
    #allocation9 [shape = 'u8[4096]{0}', space=vmem, size = 0x1000, scoped, tag = 'output window, operand 0, single buffered']
    #allocation10 [shape = 'u8[32768]{0}', space=vmem, size = 0x8000, scoped, tag = 'output window, operand 1, single buffered']
    #allocation11 [shape = 's32[1]{0}', space=sflag, size = 0x4, scoped, tag = 'scoped memory for tpu_custom_call.1']
    %14 = vsyncpa [#allocation4], 0
    %15 = vsyncpa [#allocation7], 0
    %16 = vsyncpa [#allocation5], 0
    %17 = vsyncpa [#allocation11], 0
    // Predicated region
    $region2: #{tpu_custom_call.1} parent=1 // pred_check
      _
    $region3: #{tpu_custom_call.1} parent=1 // pred_check_branch
      %19 = sbr.rel (0) target = $region5
    $region4: #{tpu_custom_call.1} parent=1 // pred_region
      %s21 = ssub.s32 128, 128
      %22 = vsyncadd [#allocation4], %s21
      %s24 = sshll.u32 [#allocation3], 4
      %s25 = int_to_ptr.vmem [resolvable:$true] %s24
      %27 = dma.hbm_to_vmem [thread:$0]  %s0, 128, %s25, [#allocation4]
    $region5: #{tpu_custom_call.1} parent=1 // pred_fallthru
      _
    // Predicated region
    $region6: #{tpu_custom_call.1} parent=1 // pred_check
      _
    $region7: #{tpu_custom_call.1} parent=1 // pred_check_branch
      %29 = sbr.rel (0) target = $region9
    $region8: #{tpu_custom_call.1} parent=1 // pred_region
      %s31 = ssub.s32 1024, 1024
      %32 = vsyncadd [#allocation7], %s31
      %s33 = sshll.u32 [#allocation6], 4
      %s34 = int_to_ptr.vmem [resolvable:$true] %s33
      %39 = dma.hbm_to_vmem [thread:$0]  %s1, 1024, %s34, [#allocation7], 64, 64, 4
    $region9: #{tpu_custom_call.1} parent=1 // pred_fallthru
      _
    // Predicated region
    $region10: #{tpu_custom_call.1} parent=1 // pred_check
      _
    $region11: #{tpu_custom_call.1} parent=1 // pred_check_branch
      %41 = sbr.rel (0) target = $region13
    $region12: #{tpu_custom_call.1} parent=1 // pred_region
      %s43 = ssub.s32 2048, 2048
      %44 = vsyncadd [#allocation7], %s43
      %s45 = sshll.u32 [#allocation8], 4
      %s46 = int_to_ptr.vmem [resolvable:$true] %s45
      %51 = dma.hbm_to_vmem [thread:$0]  %s2, 2048, %s46, [#allocation7], 128, 128, 8
    $region13: #{tpu_custom_call.1} parent=1 // pred_fallthru
      _
    // Predicated region
    $region14: #{tpu_custom_call.1} parent=1 // pred_check
      _
    $region15: #{tpu_custom_call.1} parent=1 // pred_check_branch
      %53 = sbr.rel (0) target = $region17
    $region16: #{tpu_custom_call.1} parent=1 // pred_region
      _
    $region17: #{tpu_custom_call.1} parent=1 // pred_fallthru
      _
    // Predicated region
    $region18: #{tpu_custom_call.1} parent=1 // pred_check
      _
    $region19: #{tpu_custom_call.1} parent=1 // pred_check_branch
      %55 = sbr.rel (0) target = $region21
    $region20: #{tpu_custom_call.1} parent=1 // pred_region
      _
    $region21: #{tpu_custom_call.1} parent=1 // pred_fallthru
      _
    // Predicated region
    $region22: #{tpu_custom_call.1} parent=1 // pred_check
      _
    $region23: #{tpu_custom_call.1} parent=1 // pred_check_branch
      %57 = sbr.rel (0) target = $region25
    $region24: #{tpu_custom_call.1} parent=1 // pred_region
      _
    $region25: #{tpu_custom_call.1} parent=1 // pred_fallthru
      _
    // Predicated region
    $region26: #{tpu_custom_call.1} parent=1 // pred_check
      _
    $region27: #{tpu_custom_call.1} parent=1 // pred_check_branch
      %59 = sbr.rel (0) target = $region29
    $region28: #{tpu_custom_call.1} parent=1 // pred_region
      %60 = dma.done [#allocation4], 128
    $region29: #{tpu_custom_call.1} parent=1 // pred_fallthru
      _
    // Predicated region
    $region30: #{tpu_custom_call.1} parent=1 // pred_check
      _
    $region31: #{tpu_custom_call.1} parent=1 // pred_check_branch
      %62 = sbr.rel (0) target = $region33
    $region32: #{tpu_custom_call.1} parent=1 // pred_region
      %63 = dma.done [#allocation7], 1024
    $region33: #{tpu_custom_call.1} parent=1 // pred_fallthru
      _
    // Predicated region
    $region34: #{tpu_custom_call.1} parent=1 // pred_check
      _
    $region35: #{tpu_custom_call.1} parent=1 // pred_check_branch
      %65 = sbr.rel (0) target = $region37
    $region36: #{tpu_custom_call.1} parent=1 // pred_region
      %66 = dma.done [#allocation7], 2048
    $region37: #{tpu_custom_call.1} parent=1 // pred_fallthru
      _
    %v68 = vlaneseq
    %v69 = vand.u32 %v68, 127
    %v70 = vld [vmem:[#allocation6] sm:$0xf]
    %v71 = vld [vmem:[#allocation6 + $0x4] sm:$0xf]
    %v72 = vld [vmem:[#allocation6 + $0x8] sm:$0xf]
    %v73 = vld [vmem:[#allocation6 + $0xc] sm:$0xf]
    %v74 = vld [vmem:[#allocation6 + $0x10] sm:$0xf]
    %v75 = vld [vmem:[#allocation6 + $0x14] sm:$0xf]
    %v76 = vld [vmem:[#allocation6 + $0x18] sm:$0xf]
    %v77 = vld [vmem:[#allocation6 + $0x1c] sm:$0xf]
    %v78 = vld [vmem:[#allocation6 + $0x20] sm:$0xf]
    %v79 = vld [vmem:[#allocation6 + $0x24] sm:$0xf]
    %v80 = vld [vmem:[#allocation6 + $0x28] sm:$0xf]
    %v81 = vld [vmem:[#allocation6 + $0x2c] sm:$0xf]
    %v82 = vld [vmem:[#allocation6 + $0x30] sm:$0xf]
    %v83 = vld [vmem:[#allocation6 + $0x34] sm:$0xf]
    %v84 = vld [vmem:[#allocation6 + $0x38] sm:$0xf]
    %v85 = vld [vmem:[#allocation6 + $0x3c] sm:$0xf]
    %v86 = vld [vmem:[#allocation3] sm:$0xff]
    %87 = vset.pattern.permute.xlu0 0
    %88 = vperm.xlu0 %87, %v86
    %v89 = vpop.permute.xlu0 %88
    %vm90 = vcmp.eq.s32.totalorder %v89, %v69
    %v91 = vsel %vm90, 1, 0
    %v92 = vcvt.s32.f32 %v91
    %v93 = vpack.c.bf16 %v92, %v92
    %v110 = vunpack.c.l.b16 %v70
    %v111 = vunpack.c.l.b16 %v71
    %v112 = vunpack.c.l.b16 %v72
    %v113 = vunpack.c.l.b16 %v73
    %v114 = vunpack.c.l.b16 %v74
    %v115 = vunpack.c.l.b16 %v75
    %v116 = vunpack.c.l.b16 %v76
    %v117 = vunpack.c.l.b16 %v77
    %v118 = vunpack.c.l.b16 %v78
    %v119 = vunpack.c.l.b16 %v79
    %v120 = vunpack.c.l.b16 %v80
    %v121 = vunpack.c.l.b16 %v81
    %v122 = vunpack.c.l.b16 %v82
    %v123 = vunpack.c.l.b16 %v83
    %v124 = vunpack.c.l.b16 %v84
    %v125 = vunpack.c.l.b16 %v85
    %v126 = vpack.c.b16 %v111, %v110
    %v127 = vpack.c.b16 %v113, %v112
    %v128 = vpack.c.b16 %v115, %v114
    %v129 = vpack.c.b16 %v117, %v116
    %v130 = vpack.c.b16 %v119, %v118
    %v131 = vpack.c.b16 %v121, %v120
    %v132 = vpack.c.b16 %v123, %v122
    %v133 = vpack.c.b16 %v125, %v124
    %142 = vmatprep.subr.bf16.mxu0 0
    %143 = vmatpush1.bf16.msra.mxu0 %v126
    %144 = vmatprep.subr.bf16.mxu0 0
    %145 = vmatpush1.bf16.msra.mxu0 %v127
    %146 = vmatprep.subr.bf16.mxu0 0
    %147 = vmatpush1.bf16.msra.mxu0 %v128
    %148 = vmatprep.subr.bf16.mxu0 0
    %149 = vmatpush1.bf16.msra.mxu0 %v129
    %150 = vmatprep.subr.bf16.mxu0 0
    %151 = vmatpush1.bf16.msra.mxu0 %v130
    %152 = vmatprep.subr.bf16.mxu0 0
    %153 = vmatpush1.bf16.msra.mxu0 %v131
    %154 = vmatprep.subr.bf16.mxu0 0
    %155 = vmatpush1.bf16.msra.mxu0 %v132
    %156 = vmatprep.subr.bf16.mxu0 0
    %157 = vmatpush1.bf16.msra.mxu0 %v133
    %158 = vmatprep.subr.bf16.mxu0 0
    %159 = vmatpush1.bf16.msra.mxu0 0
    %160 = vmatprep.subr.bf16.mxu0 0
    %161 = vmatpush1.bf16.msra.mxu0 0
    %162 = vmatprep.subr.bf16.mxu0 0
    %163 = vmatpush1.bf16.msra.mxu0 0
    %164 = vmatprep.subr.bf16.mxu0 0
    %165 = vmatpush1.bf16.msra.mxu0 0
    %166 = vmatprep.subr.bf16.mxu0 0
    %167 = vmatpush1.bf16.msra.mxu0 0
    %168 = vmatprep.subr.bf16.mxu0 0
    %169 = vmatpush1.bf16.msra.mxu0 0
    %170 = vmatprep.subr.bf16.mxu0 0
    %171 = vmatpush1.bf16.msra.mxu0 0
    %172 = vmatprep.subr.bf16.mxu0 0
    %173 = vmatpush1.bf16.msra.mxu0 0
    %174 = vmatprep.mubr.bf16.mxu0 0
    %175 = vmatmul.mubr.bf16.gmra.mrb[0].mxu0 %v93
    %v176 = vpop.f32.mrb[0].mxu0
    %v177 = vadd.f32 0.0, %v176
    %v178 = vpop.f32.mrb[0].mxu0
    %v179 = vpop.f32.mrb[0].mxu0
    %v180 = vpop.f32.mrb[0].mxu0
    %181 = vdwg.mxu0
    %182 = vst [vmem:[#allocation10] sm:$0xff] %v177
    %v183 = vadd.f32 %v177, 0.0
    %v184 = vld [vmem:[#allocation3] sm:$0xff]
    %185 = vset.pattern.permute.xlu0 1
    %186 = vperm.xlu0 %185, %v184
    %v187 = vpop.permute.xlu0 %186
    %vm188 = vcmp.eq.s32.totalorder %v187, %v69
    %v189 = vsel %vm188, 1, 0
    %v190 = vcvt.s32.f32 %v189
    %v191 = vpack.c.bf16 %v190, %v190
    %192 = vmatprep.subr.bf16.mxu0 0
    %193 = vmatpush1.bf16.msra.mxu0 %v126
    %194 = vmatprep.subr.bf16.mxu0 0
    %195 = vmatpush1.bf16.msra.mxu0 %v127
    %196 = vmatprep.subr.bf16.mxu0 0
    %197 = vmatpush1.bf16.msra.mxu0 %v128
    %198 = vmatprep.subr.bf16.mxu0 0
    %199 = vmatpush1.bf16.msra.mxu0 %v129
    %200 = vmatprep.subr.bf16.mxu0 0
    %201 = vmatpush1.bf16.msra.mxu0 %v130
    %202 = vmatprep.subr.bf16.mxu0 0
    %203 = vmatpush1.bf16.msra.mxu0 %v131
    %204 = vmatprep.subr.bf16.mxu0 0
    %205 = vmatpush1.bf16.msra.mxu0 %v132
    %206 = vmatprep.subr.bf16.mxu0 0
    %207 = vmatpush1.bf16.msra.mxu0 %v133
    %208 = vmatprep.subr.bf16.mxu0 0
    %209 = vmatpush1.bf16.msra.mxu0 0
    %210 = vmatprep.subr.bf16.mxu0 0
    %211 = vmatpush1.bf16.msra.mxu0 0
    %212 = vmatprep.subr.bf16.mxu0 0
    %213 = vmatpush1.bf16.msra.mxu0 0
    %214 = vmatprep.subr.bf16.mxu0 0
    %215 = vmatpush1.bf16.msra.mxu0 0
    %216 = vmatprep.subr.bf16.mxu0 0
    %217 = vmatpush1.bf16.msra.mxu0 0
    %218 = vmatprep.subr.bf16.mxu0 0
    %219 = vmatpush1.bf16.msra.mxu0 0
    %220 = vmatprep.subr.bf16.mxu0 0
    %221 = vmatpush1.bf16.msra.mxu0 0
    %222 = vmatprep.subr.bf16.mxu0 0
    %223 = vmatpush1.bf16.msra.mxu0 0
    %224 = vmatprep.mubr.bf16.mxu0 0
    %225 = vmatmul.mubr.bf16.gmra.mrb[0].mxu0 %v191
    %v226 = vpop.f32.mrb[0].mxu0
    %v227 = vadd.f32 0.0, %v226
    %v228 = vpop.f32.mrb[0].mxu0
    %v229 = vpop.f32.mrb[0].mxu0
    %v230 = vpop.f32.mrb[0].mxu0
    %231 = vdwg.mxu0
    %s232 = scalar_lea.vmem [#allocation10], 8
    %233 = vst [vmem:[%s232] sm:$0xff] %v227
    %v234 = vadd.f32 %v183, %v227
    %v235 = vld [vmem:[#allocation3] sm:$0xff]
    %236 = vset.pattern.permute.xlu0 2
    %237 = vperm.xlu0 %236, %v235
    %v238 = vpop.permute.xlu0 %237
    %vm239 = vcmp.eq.s32.totalorder %v238, %v69
    %v240 = vsel %vm239, 1, 0
    %v241 = vcvt.s32.f32 %v240
    %v242 = vpack.c.bf16 %v241, %v241
    %243 = vmatprep.subr.bf16.mxu0 0
    %244 = vmatpush1.bf16.msra.mxu0 %v126
    %245 = vmatprep.subr.bf16.mxu0 0
    %246 = vmatpush1.bf16.msra.mxu0 %v127
    %247 = vmatprep.subr.bf16.mxu0 0
    %248 = vmatpush1.bf16.msra.mxu0 %v128
    %249 = vmatprep.subr.bf16.mxu0 0
    %250 = vmatpush1.bf16.msra.mxu0 %v129
    %251 = vmatprep.subr.bf16.mxu0 0
    %252 = vmatpush1.bf16.msra.mxu0 %v130
    %253 = vmatprep.subr.bf16.mxu0 0
    %254 = vmatpush1.bf16.msra.mxu0 %v131
    %255 = vmatprep.subr.bf16.mxu0 0
    %256 = vmatpush1.bf16.msra.mxu0 %v132
    %257 = vmatprep.subr.bf16.mxu0 0
    %258 = vmatpush1.bf16.msra.mxu0 %v133
    %259 = vmatprep.subr.bf16.mxu0 0
    %260 = vmatpush1.bf16.msra.mxu0 0
    %261 = vmatprep.subr.bf16.mxu0 0
    %262 = vmatpush1.bf16.msra.mxu0 0
    %263 = vmatprep.subr.bf16.mxu0 0
    %264 = vmatpush1.bf16.msra.mxu0 0
    %265 = vmatprep.subr.bf16.mxu0 0
    %266 = vmatpush1.bf16.msra.mxu0 0
    %267 = vmatprep.subr.bf16.mxu0 0
    %268 = vmatpush1.bf16.msra.mxu0 0
    %269 = vmatprep.subr.bf16.mxu0 0
    %270 = vmatpush1.bf16.msra.mxu0 0
    %271 = vmatprep.subr.bf16.mxu0 0
    %272 = vmatpush1.bf16.msra.mxu0 0
    %273 = vmatprep.subr.bf16.mxu0 0
    %274 = vmatpush1.bf16.msra.mxu0 0
    %275 = vmatprep.mubr.bf16.mxu0 0
    %276 = vmatmul.mubr.bf16.gmra.mrb[0].mxu0 %v242
    %v277 = vpop.f32.mrb[0].mxu0
    %v278 = vadd.f32 0.0, %v277
    %v279 = vpop.f32.mrb[0].mxu0
    %v280 = vpop.f32.mrb[0].mxu0
    %v281 = vpop.f32.mrb[0].mxu0
    %282 = vdwg.mxu0
    %s283 = scalar_lea.vmem [#allocation10], 16
    %284 = vst [vmem:[%s283] sm:$0xff] %v278
    %v285 = vadd.f32 %v234, %v278
    %v286 = vld [vmem:[#allocation3] sm:$0xff]
    %287 = vset.pattern.permute.xlu0 3
    %288 = vperm.xlu0 %287, %v286
    %v289 = vpop.permute.xlu0 %288
    %vm290 = vcmp.eq.s32.totalorder %v289, %v69
    %v291 = vsel %vm290, 1, 0
    %v292 = vcvt.s32.f32 %v291
    %v293 = vpack.c.bf16 %v292, %v292
    %294 = vmatprep.subr.bf16.mxu0 0
    %295 = vmatpush1.bf16.msra.mxu0 %v126
    %296 = vmatprep.subr.bf16.mxu0 0
    %297 = vmatpush1.bf16.msra.mxu0 %v127
    %298 = vmatprep.subr.bf16.mxu0 0
    %299 = vmatpush1.bf16.msra.mxu0 %v128
    %300 = vmatprep.subr.bf16.mxu0 0
    %301 = vmatpush1.bf16.msra.mxu0 %v129
    %302 = vmatprep.subr.bf16.mxu0 0
    %303 = vmatpush1.bf16.msra.mxu0 %v130
    %304 = vmatprep.subr.bf16.mxu0 0
    %305 = vmatpush1.bf16.msra.mxu0 %v131
    %306 = vmatprep.subr.bf16.mxu0 0
    %307 = vmatpush1.bf16.msra.mxu0 %v132
    %308 = vmatprep.subr.bf16.mxu0 0
    %309 = vmatpush1.bf16.msra.mxu0 %v133
    %310 = vmatprep.subr.bf16.mxu0 0
    %311 = vmatpush1.bf16.msra.mxu0 0
    %312 = vmatprep.subr.bf16.mxu0 0
    %313 = vmatpush1.bf16.msra.mxu0 0
    %314 = vmatprep.subr.bf16.mxu0 0
    %315 = vmatpush1.bf16.msra.mxu0 0
    %316 = vmatprep.subr.bf16.mxu0 0
    %317 = vmatpush1.bf16.msra.mxu0 0
    %318 = vmatprep.subr.bf16.mxu0 0
    %319 = vmatpush1.bf16.msra.mxu0 0
    %320 = vmatprep.subr.bf16.mxu0 0
    %321 = vmatpush1.bf16.msra.mxu0 0
    %322 = vmatprep.subr.bf16.mxu0 0
    %323 = vmatpush1.bf16.msra.mxu0 0
    %324 = vmatprep.subr.bf16.mxu0 0
    %325 = vmatpush1.bf16.msra.mxu0 0
    %326 = vmatprep.mubr.bf16.mxu0 0
    %327 = vmatmul.mubr.bf16.gmra.mrb[0].mxu0 %v293
    %v328 = vpop.f32.mrb[0].mxu0
    %v329 = vadd.f32 0.0, %v328
    %v330 = vpop.f32.mrb[0].mxu0
    %v331 = vpop.f32.mrb[0].mxu0
    %v332 = vpop.f32.mrb[0].mxu0
    %333 = vdwg.mxu0
    %s334 = scalar_lea.vmem [#allocation10], 24
    %335 = vst [vmem:[%s334] sm:$0xff] %v329
    %v336 = vadd.f32 %v285, %v329
    %v337 = vld [vmem:[#allocation3] sm:$0xff]
    %338 = vset.pattern.permute.xlu0 4
    %339 = vperm.xlu0 %338, %v337
    %v340 = vpop.permute.xlu0 %339
    %vm341 = vcmp.eq.s32.totalorder %v340, %v69
    %v342 = vsel %vm341, 1, 0
    %v343 = vcvt.s32.f32 %v342
    %v344 = vpack.c.bf16 %v343, %v343
    %345 = vmatprep.subr.bf16.mxu0 0
    %346 = vmatpush1.bf16.msra.mxu0 %v126
    %347 = vmatprep.subr.bf16.mxu0 0
    %348 = vmatpush1.bf16.msra.mxu0 %v127
    %349 = vmatprep.subr.bf16.mxu0 0
    %350 = vmatpush1.bf16.msra.mxu0 %v128
    %351 = vmatprep.subr.bf16.mxu0 0
    %352 = vmatpush1.bf16.msra.mxu0 %v129
    %353 = vmatprep.subr.bf16.mxu0 0
    %354 = vmatpush1.bf16.msra.mxu0 %v130
    %355 = vmatprep.subr.bf16.mxu0 0
    %356 = vmatpush1.bf16.msra.mxu0 %v131
    %357 = vmatprep.subr.bf16.mxu0 0
    %358 = vmatpush1.bf16.msra.mxu0 %v132
    %359 = vmatprep.subr.bf16.mxu0 0
    %360 = vmatpush1.bf16.msra.mxu0 %v133
    %361 = vmatprep.subr.bf16.mxu0 0
    %362 = vmatpush1.bf16.msra.mxu0 0
    %363 = vmatprep.subr.bf16.mxu0 0
    %364 = vmatpush1.bf16.msra.mxu0 0
    %365 = vmatprep.subr.bf16.mxu0 0
    %366 = vmatpush1.bf16.msra.mxu0 0
    %367 = vmatprep.subr.bf16.mxu0 0
    %368 = vmatpush1.bf16.msra.mxu0 0
    %369 = vmatprep.subr.bf16.mxu0 0
    %370 = vmatpush1.bf16.msra.mxu0 0
    %371 = vmatprep.subr.bf16.mxu0 0
    %372 = vmatpush1.bf16.msra.mxu0 0
    %373 = vmatprep.subr.bf16.mxu0 0
    %374 = vmatpush1.bf16.msra.mxu0 0
    %375 = vmatprep.subr.bf16.mxu0 0
    %376 = vmatpush1.bf16.msra.mxu0 0
    %377 = vmatprep.mubr.bf16.mxu0 0
    %378 = vmatmul.mubr.bf16.gmra.mrb[0].mxu0 %v344
    %v379 = vpop.f32.mrb[0].mxu0
    %v380 = vadd.f32 0.0, %v379
    %v381 = vpop.f32.mrb[0].mxu0
    %v382 = vpop.f32.mrb[0].mxu0
    %v383 = vpop.f32.mrb[0].mxu0
    %384 = vdwg.mxu0
    %s385 = scalar_lea.vmem [#allocation10], 32
    %386 = vst [vmem:[%s385] sm:$0xff] %v380
    %v387 = vadd.f32 %v336, %v380
    %v388 = vld [vmem:[#allocation3] sm:$0xff]
    %389 = vset.pattern.permute.xlu0 5
    %390 = vperm.xlu0 %389, %v388
    %v391 = vpop.permute.xlu0 %390
    %vm392 = vcmp.eq.s32.totalorder %v391, %v69
    %v393 = vsel %vm392, 1, 0
    %v394 = vcvt.s32.f32 %v393
    %v395 = vpack.c.bf16 %v394, %v394
    %396 = vmatprep.subr.bf16.mxu0 0
    %397 = vmatpush1.bf16.msra.mxu0 %v126
    %398 = vmatprep.subr.bf16.mxu0 0
    %399 = vmatpush1.bf16.msra.mxu0 %v127
    %400 = vmatprep.subr.bf16.mxu0 0
    %401 = vmatpush1.bf16.msra.mxu0 %v128
    %402 = vmatprep.subr.bf16.mxu0 0
    %403 = vmatpush1.bf16.msra.mxu0 %v129
    %404 = vmatprep.subr.bf16.mxu0 0
    %405 = vmatpush1.bf16.msra.mxu0 %v130
    %406 = vmatprep.subr.bf16.mxu0 0
    %407 = vmatpush1.bf16.msra.mxu0 %v131
    %408 = vmatprep.subr.bf16.mxu0 0
    %409 = vmatpush1.bf16.msra.mxu0 %v132
    %410 = vmatprep.subr.bf16.mxu0 0
    %411 = vmatpush1.bf16.msra.mxu0 %v133
    %412 = vmatprep.subr.bf16.mxu0 0
    %413 = vmatpush1.bf16.msra.mxu0 0
    %414 = vmatprep.subr.bf16.mxu0 0
    %415 = vmatpush1.bf16.msra.mxu0 0
    %416 = vmatprep.subr.bf16.mxu0 0
    %417 = vmatpush1.bf16.msra.mxu0 0
    %418 = vmatprep.subr.bf16.mxu0 0
    %419 = vmatpush1.bf16.msra.mxu0 0
    %420 = vmatprep.subr.bf16.mxu0 0
    %421 = vmatpush1.bf16.msra.mxu0 0
    %422 = vmatprep.subr.bf16.mxu0 0
    %423 = vmatpush1.bf16.msra.mxu0 0
    %424 = vmatprep.subr.bf16.mxu0 0
    %425 = vmatpush1.bf16.msra.mxu0 0
    %426 = vmatprep.subr.bf16.mxu0 0
    %427 = vmatpush1.bf16.msra.mxu0 0
    %428 = vmatprep.mubr.bf16.mxu0 0
    %429 = vmatmul.mubr.bf16.gmra.mrb[0].mxu0 %v395
    %v430 = vpop.f32.mrb[0].mxu0
    %v431 = vadd.f32 0.0, %v430
    %v432 = vpop.f32.mrb[0].mxu0
    %v433 = vpop.f32.mrb[0].mxu0
    %v434 = vpop.f32.mrb[0].mxu0
    %435 = vdwg.mxu0
    %s436 = scalar_lea.vmem [#allocation10], 40
    %437 = vst [vmem:[%s436] sm:$0xff] %v431
    %v438 = vadd.f32 %v387, %v431
    %v439 = vld [vmem:[#allocation3] sm:$0xff]
    %440 = vset.pattern.permute.xlu0 6
    %441 = vperm.xlu0 %440, %v439
    %v442 = vpop.permute.xlu0 %441
    %vm443 = vcmp.eq.s32.totalorder %v442, %v69
    %v444 = vsel %vm443, 1, 0
    %v445 = vcvt.s32.f32 %v444
    %v446 = vpack.c.bf16 %v445, %v445
    %447 = vmatprep.subr.bf16.mxu0 0
    %448 = vmatpush1.bf16.msra.mxu0 %v126
    %449 = vmatprep.subr.bf16.mxu0 0
    %450 = vmatpush1.bf16.msra.mxu0 %v127
    %451 = vmatprep.subr.bf16.mxu0 0
    %452 = vmatpush1.bf16.msra.mxu0 %v128
    %453 = vmatprep.subr.bf16.mxu0 0
    %454 = vmatpush1.bf16.msra.mxu0 %v129
    %455 = vmatprep.subr.bf16.mxu0 0
    %456 = vmatpush1.bf16.msra.mxu0 %v130
    %457 = vmatprep.subr.bf16.mxu0 0
    %458 = vmatpush1.bf16.msra.mxu0 %v131
    %459 = vmatprep.subr.bf16.mxu0 0
    %460 = vmatpush1.bf16.msra.mxu0 %v132
    %461 = vmatprep.subr.bf16.mxu0 0
    %462 = vmatpush1.bf16.msra.mxu0 %v133
    %463 = vmatprep.subr.bf16.mxu0 0
    %464 = vmatpush1.bf16.msra.mxu0 0
    %465 = vmatprep.subr.bf16.mxu0 0
    %466 = vmatpush1.bf16.msra.mxu0 0
    %467 = vmatprep.subr.bf16.mxu0 0
    %468 = vmatpush1.bf16.msra.mxu0 0
    %469 = vmatprep.subr.bf16.mxu0 0
    %470 = vmatpush1.bf16.msra.mxu0 0
    %471 = vmatprep.subr.bf16.mxu0 0
    %472 = vmatpush1.bf16.msra.mxu0 0
    %473 = vmatprep.subr.bf16.mxu0 0
    %474 = vmatpush1.bf16.msra.mxu0 0
    %475 = vmatprep.subr.bf16.mxu0 0
    %476 = vmatpush1.bf16.msra.mxu0 0
    %477 = vmatprep.subr.bf16.mxu0 0
    %478 = vmatpush1.bf16.msra.mxu0 0
    %479 = vmatprep.mubr.bf16.mxu0 0
    %480 = vmatmul.mubr.bf16.gmra.mrb[0].mxu0 %v446
    %v481 = vpop.f32.mrb[0].mxu0
    %v482 = vadd.f32 0.0, %v481
    %v483 = vpop.f32.mrb[0].mxu0
    %v484 = vpop.f32.mrb[0].mxu0
    %v485 = vpop.f32.mrb[0].mxu0
    %486 = vdwg.mxu0
    %s487 = scalar_lea.vmem [#allocation10], 48
    %488 = vst [vmem:[%s487] sm:$0xff] %v482
    %v489 = vadd.f32 %v438, %v482
    %v490 = vld [vmem:[#allocation3] sm:$0xff]
    %491 = vset.pattern.permute.xlu0 7
    %492 = vperm.xlu0 %491, %v490
    %v493 = vpop.permute.xlu0 %492
    %vm494 = vcmp.eq.s32.totalorder %v493, %v69
    %v495 = vsel %vm494, 1, 0
    %v496 = vcvt.s32.f32 %v495
    %v497 = vpack.c.bf16 %v496, %v496
    %498 = vmatprep.subr.bf16.mxu0 0
    %499 = vmatpush1.bf16.msra.mxu0 %v126
    %500 = vmatprep.subr.bf16.mxu0 0
    %501 = vmatpush1.bf16.msra.mxu0 %v127
    %502 = vmatprep.subr.bf16.mxu0 0
    %503 = vmatpush1.bf16.msra.mxu0 %v128
    %504 = vmatprep.subr.bf16.mxu0 0
    %505 = vmatpush1.bf16.msra.mxu0 %v129
    %506 = vmatprep.subr.bf16.mxu0 0
    %507 = vmatpush1.bf16.msra.mxu0 %v130
    %508 = vmatprep.subr.bf16.mxu0 0
    %509 = vmatpush1.bf16.msra.mxu0 %v131
    %510 = vmatprep.subr.bf16.mxu0 0
    %511 = vmatpush1.bf16.msra.mxu0 %v132
    %512 = vmatprep.subr.bf16.mxu0 0
    %513 = vmatpush1.bf16.msra.mxu0 %v133
    %514 = vmatprep.subr.bf16.mxu0 0
    %515 = vmatpush1.bf16.msra.mxu0 0
    %516 = vmatprep.subr.bf16.mxu0 0
    %517 = vmatpush1.bf16.msra.mxu0 0
    %518 = vmatprep.subr.bf16.mxu0 0
    %519 = vmatpush1.bf16.msra.mxu0 0
    %520 = vmatprep.subr.bf16.mxu0 0
    %521 = vmatpush1.bf16.msra.mxu0 0
    %522 = vmatprep.subr.bf16.mxu0 0
    %523 = vmatpush1.bf16.msra.mxu0 0
    %524 = vmatprep.subr.bf16.mxu0 0
    %525 = vmatpush1.bf16.msra.mxu0 0
    %526 = vmatprep.subr.bf16.mxu0 0
    %527 = vmatpush1.bf16.msra.mxu0 0
    %528 = vmatprep.subr.bf16.mxu0 0
    %529 = vmatpush1.bf16.msra.mxu0 0
    %530 = vmatprep.mubr.bf16.mxu0 0
    %531 = vmatmul.mubr.bf16.gmra.mrb[0].mxu0 %v497
    %v532 = vpop.f32.mrb[0].mxu0
    %v533 = vadd.f32 0.0, %v532
    %v534 = vpop.f32.mrb[0].mxu0
    %v535 = vpop.f32.mrb[0].mxu0
    %v536 = vpop.f32.mrb[0].mxu0
    %537 = vdwg.mxu0
    %s538 = scalar_lea.vmem [#allocation10], 56
    %539 = vst [vmem:[%s538] sm:$0xff] %v533
    %v540 = vadd.f32 %v489, %v533
    %v541 = vmul.f32 %v540, 0.125
    %v542 = vld [vmem:[#allocation8] sm:$0xff]
    %v543 = vld [vmem:[#allocation8 + $0x8] sm:$0xff]
    %v544 = vld [vmem:[#allocation8 + $0x10] sm:$0xff]
    %v545 = vld [vmem:[#allocation8 + $0x18] sm:$0xff]
    %v546 = vld [vmem:[#allocation8 + $0x20] sm:$0xff]
    %v547 = vld [vmem:[#allocation8 + $0x28] sm:$0xff]
    %v548 = vld [vmem:[#allocation8 + $0x30] sm:$0xff]
    %v549 = vld [vmem:[#allocation8 + $0x38] sm:$0xff]
    %v550 = vld [vmem:[#allocation8 + $0x40] sm:$0xff]
    %v551 = vld [vmem:[#allocation8 + $0x48] sm:$0xff]
    %v552 = vld [vmem:[#allocation8 + $0x50] sm:$0xff]
    %v553 = vld [vmem:[#allocation8 + $0x58] sm:$0xff]
    %v554 = vld [vmem:[#allocation8 + $0x60] sm:$0xff]
    %v555 = vld [vmem:[#allocation8 + $0x68] sm:$0xff]
    %v556 = vld [vmem:[#allocation8 + $0x70] sm:$0xff]
    %v557 = vld [vmem:[#allocation8 + $0x78] sm:$0xff]
    %v558 = vld [vmem:[%s3] sm:$0x1]
    %v560 = vlaneseq
    %v561 = vshrl.u32 %v560, 7
    %v562 = vsub.s32 0, %v561
    %v563 = vrot.slane %v558, %v562
    %565 = vmatprep.subr.mxu0 0.0
    %566 = vmatpush1.msra.mxu0 %v542
    %567 = vmatprep.subr.mxu0 0.0
    %568 = vmatpush1.msra.mxu0 %v543
    %569 = vmatprep.subr.mxu0 0.0
    %570 = vmatpush1.msra.mxu0 %v544
    %571 = vmatprep.subr.mxu0 0.0
    %572 = vmatpush1.msra.mxu0 %v545
    %573 = vmatprep.subr.mxu0 0.0
    %574 = vmatpush1.msra.mxu0 %v546
    %575 = vmatprep.subr.mxu0 0.0
    %576 = vmatpush1.msra.mxu0 %v547
    %577 = vmatprep.subr.mxu0 0.0
    %578 = vmatpush1.msra.mxu0 %v548
    %579 = vmatprep.subr.mxu0 0.0
    %580 = vmatpush1.msra.mxu0 %v549
    %581 = vmatprep.subr.mxu0 0.0
    %582 = vmatpush1.msra.mxu0 %v550
    %583 = vmatprep.subr.mxu0 0.0
    %584 = vmatpush1.msra.mxu0 %v551
    %585 = vmatprep.subr.mxu0 0.0
    %586 = vmatpush1.msra.mxu0 %v552
    %587 = vmatprep.subr.mxu0 0.0
    %588 = vmatpush1.msra.mxu0 %v553
    %589 = vmatprep.subr.mxu0 0.0
    %590 = vmatpush1.msra.mxu0 %v554
    %591 = vmatprep.subr.mxu0 0.0
    %592 = vmatpush1.msra.mxu0 %v555
    %593 = vmatprep.subr.mxu0 0.0
    %594 = vmatpush1.msra.mxu0 %v556
    %595 = vmatprep.subr.mxu0 0.0
    %596 = vmatpush1.msra.mxu0 %v557
    %597 = vmatprep.subr.mxu0 0.0
    %598 = vmatpush1.msra.mxu0 0.0
    %599 = vmatprep.subr.mxu0 0.0
    %600 = vmatpush1.msra.mxu0 0.0
    %601 = vmatprep.subr.mxu0 0.0
    %602 = vmatpush1.msra.mxu0 0.0
    %603 = vmatprep.subr.mxu0 0.0
    %604 = vmatpush1.msra.mxu0 0.0
    %605 = vmatprep.subr.mxu0 0.0
    %606 = vmatpush1.msra.mxu0 0.0
    %607 = vmatprep.subr.mxu0 0.0
    %608 = vmatpush1.msra.mxu0 0.0
    %609 = vmatprep.subr.mxu0 0.0
    %610 = vmatpush1.msra.mxu0 0.0
    %611 = vmatprep.subr.mxu0 0.0
    %612 = vmatpush1.msra.mxu0 0.0
    %613 = vmatprep.subr.mxu0 0.0
    %614 = vmatpush1.msra.mxu0 0.0
    %615 = vmatprep.subr.mxu0 0.0
    %616 = vmatpush1.msra.mxu0 0.0
    %617 = vmatprep.subr.mxu0 0.0
    %618 = vmatpush1.msra.mxu0 0.0
    %619 = vmatprep.subr.mxu0 0.0
    %620 = vmatpush1.msra.mxu0 0.0
    %621 = vmatprep.subr.mxu0 0.0
    %622 = vmatpush1.msra.mxu0 0.0
    %623 = vmatprep.subr.mxu0 0.0
    %624 = vmatpush1.msra.mxu0 0.0
    %625 = vmatprep.subr.mxu0 0.0
    %626 = vmatpush1.msra.mxu0 0.0
    %627 = vmatprep.subr.mxu0 0.0
    %628 = vmatpush1.msra.mxu0 0.0
    %629 = vmatprep.mubr.f32.mxu0 0.0
    %630 = vmatmul.mubr.f32.gmra.mrb[0].mxu0 %v541
    %v631 = vpop.f32.mrb[0].mxu0
    %v632 = vadd.f32 %v563, %v631
    %v633 = vpop.f32.mrb[0].mxu0
    %634 = vdwg.mxu0
    %v635 = vld [vmem:[%s5] sm:$0xff]
    %s636 = sld [smem:[#allocation2]]
    %v637 = vstv %s636
    %v638 = vmul.f32 %v635, %v637
    %v639 = vadd.f32 %v632, %v638
    %vm640 = vcmp.lt.s32.totalorder %v69, 8
    %v641 = vsel %vm640, %v639, -inf
    %642 = vmax.xlane.f32.xlu0 %v641
    %v643 = vpop.xlane.xlu0 %642
    %v644 = vsub.f32 %v639, %v643
    %v645 = vmul.f32 %v644, 1.442695
    %v646 = vpow.pop %v645
    %v647 = vsel %vm640, %v646, 0.0
    %648 = vadd.xlane.f32.xlu0 %v647
    %v649 = vpop.xlane.xlu0 %648
    %v650 = vlog2.pop %v649
    %v651 = vmul.f32 %v650, 0.6931472
    %v652 = vadd.f32 %v651, %v643
    %v653 = vsub.f32 %v639, %v652
    %654 = vst [vmem:[#allocation9] sm:$0xff] %v653
    // Predicated region
    $region38: #{tpu_custom_call.1} parent=1 // pred_check
      _
    $region39: #{tpu_custom_call.1} parent=1 // pred_check_branch
      %656 = sbr.rel (0) target = $region41
    $region40: #{tpu_custom_call.1} parent=1 // pred_region
      %s658 = ssub.s32 128, 128
      %659 = vsyncadd [#allocation5], %s658
      %s661 = sshll.u32 [#allocation9], 4
      %s662 = int_to_ptr.vmem [resolvable:$true] %s661
      %664 = dma.vmem_to_hbm [thread:$0]  %s662, 128, %s6, [#allocation5]
    $region41: #{tpu_custom_call.1} parent=1 // pred_fallthru
      _
    // Predicated region
    $region42: #{tpu_custom_call.1} parent=1 // pred_check
      _
    $region43: #{tpu_custom_call.1} parent=1 // pred_check_branch
      %666 = sbr.rel (0) target = $region45
    $region44: #{tpu_custom_call.1} parent=1 // pred_region
      %s668 = ssub.s32 1024, 1024
      %669 = vsyncadd [#allocation11], %s668
      %s670 = sshll.u32 [#allocation10], 4
      %s671 = int_to_ptr.vmem [resolvable:$true] %s670
      %676 = dma.vmem_to_hbm [thread:$0]  %s671, 1024, %s7, [#allocation11], 128, 128, 8
    $region45: #{tpu_custom_call.1} parent=1 // pred_fallthru
      _
    // Predicated region
    $region46: #{tpu_custom_call.1} parent=1 // pred_check
      _
    $region47: #{tpu_custom_call.1} parent=1 // pred_check_branch
      %678 = sbr.rel (0) target = $region49
    $region48: #{tpu_custom_call.1} parent=1 // pred_region
      %679 = dma.done [#allocation5], 128
    $region49: #{tpu_custom_call.1} parent=1 // pred_fallthru
      _
    // Predicated region
    $region50: #{tpu_custom_call.1} parent=1 // pred_check
      _
    $region51: #{tpu_custom_call.1} parent=1 // pred_check_branch
      %681 = sbr.rel (0) target = $region53
    $region52: #{tpu_custom_call.1} parent=1 // pred_region
      %682 = dma.done [#allocation11], 1024
    $region53: #{tpu_custom_call.1} parent=1 // pred_fallthru
      _
    %683 = vsyncpa [#allocation4], 1
    %684 = vsyncpa [#allocation7], 1
    %685 = vsyncpa [#allocation5], 1
    %686 = vsyncpa [#allocation11], 1

</llo_original>
